<compile_context>
chip_gen: v6e
topology: v6e:2x2x1
jax: 0.10.0
libtpu: 0.0.40
codegen_flags: <defaults>
</compile_context>

<pallas_src>
import functools

import jax
import jax.numpy as jnp
from jax.experimental import pallas as pl
from jax.experimental.pallas import tpu as pltpu


# ----------------------------- configuration -------------------------------
D_X = 4                       # x feature dim (== output_dim)
D_IN = D_X + 1                # MLP input_dim = concat([t, x]) feature dim
HIDDEN = (32, 32)             # hidden_dims
H0, H1 = HIDDEN
D_OUT = D_X                   # output_dim
SLAB_ROWS = 8                 # feature-major input slab rows: [t; x(4); zeros(3)]
GUIDE_SCALE = 0.5             # guide_scale constructor arg
GUIDE_SCHED = 1.0             # guide_scheduler_func(t) = 1.0 (class default)

# guide_func(t, x, v, cfm_model) = -x + 0.1 * v  (pull-to-origin + damping)
# out = v + guide*s = (1 + 0.1*s)*v - s*x ; C_V is folded into W2/b2 at pack time.
_S = GUIDE_SCALE * GUIDE_SCHED
C_V = 1.0 + 0.1 * _S          # = 1.05  (baked into packed W2, b2)
C_X = -_S                     # = -0.5


def _round_up(n, m):
    return ((n + m - 1) // m) * m


# ------------------------------ Pallas kernel -------------------------------
def _make_kernel(nsub, sub):
    """Kernel over one (SLAB_ROWS, tile) input block; tile = nsub * sub lanes."""

    def kernel(z_ref, w0_ref, b0_ref, w1_ref, b1_ref, w2_ref, b2_ref, out_ref):
        # Weights / biases are tiny, loop-invariant: load + broadcast once.
        W0 = w0_ref[...]                                   # (H0, SLAB_ROWS) f32
        W1 = w1_ref[...]                                   # (H1, H0)        f32
        W2 = w2_ref[...]                                   # (D_OUT, H1)     f32 (pre-scaled by C_V)
        b0 = jnp.broadcast_to(b0_ref[...], (H0, sub))
        b1 = jnp.broadcast_to(b1_ref[...], (H1, sub))
        b2 = jnp.broadcast_to(b2_ref[...], (D_OUT, sub))

        @pl.loop(0, nsub)
        def _(s):
            off = pl.multiple_of(s * sub, sub)
            z = z_ref[:, pl.ds(off, sub)].astype(jnp.float32)   # (SLAB_ROWS, sub)

            # layer 0: Linear(concat([t, x])) + relu (t already folded into slab)
            h = jnp.maximum(
                jnp.dot(W0, z, preferred_element_type=jnp.float32) + b0, 0.0)
            # layer 1: Linear + relu  (act2=None in this instantiation)
            h = jnp.maximum(
                jnp.dot(W1, h, preferred_element_type=jnp.float32) + b1, 0.0)
            # final layer (guide C_V already folded into W2/b2)
            v = jnp.dot(W2, h, preferred_element_type=jnp.float32) + b2

            # guided correction epilogue: out = C_V*v + C_X*x  (single FMA)
            x_rows = z[1:1 + D_X, :]                            # x lives in rows 1..4
            out_ref[:, pl.ds(off, sub)] = (v + C_X * x_rows).astype(out_ref.dtype)

    return kernel


# ------------------------------ parameter packing ---------------------------
def pack_params(params):
    """Pack the 6 Linear params, feature-major, with guide C_V folded into W2/b2."""
    w0, b0, w1, b1, w2, b2 = params                # w0: (D_IN, H0), row 0 = t
    w0s = jnp.pad(w0.T, ((0, 0), (0, SLAB_ROWS - D_IN)))     # (H0, SLAB_ROWS)
    b0c = b0.reshape(H0, 1)
    w1t = w1.T                                                # (H1, H0)
    b1c = b1.reshape(H1, 1)
    w2t = (C_V * w2.T).astype(jnp.float32)                    # (D_OUT, H1)
    b2c = (C_V * b2).reshape(D_OUT, 1)
    return w0s, b0c, w1t, b1c, w2t, b2c


# ------------------------------- host wrapper --------------------------------
def _choose_tile(B, tile_b, sub):
    """Batch tile (lanes): as large as tile_b, multiple of `sub`, but capped so
    the grid has >= 2 steps when the batch allows it (v7x has 2 TensorCores)."""
    Bs = _round_up(B, sub)
    if Bs <= sub:
        return sub
    half = _round_up(pl.cdiv(Bs, 2), sub)
    return max(sub, min(_round_up(tile_b, sub), half))


def guided_mlp_forward(t, x, packed_params, y=None, *, tile_b=65536, sub=512):
    """Pallas implementation of GuidedMLPWrapper.forward(t, x, y)."""
    if y is not None:
        # TODO(synk): y-conditioned path (concat([t, x, y])) needs weights built
        # for a larger input_dim; not instantiated in this module configuration.
        raise NotImplementedError("y-conditioned path not implemented")

    w0s, b0, w1t, b1, w2t, b2 = packed_params
    B = x.shape[0]
    dtype = x.dtype

    if t.ndim != x.ndim:
        t = jnp.reshape(t, (-1, 1))
    t = jnp.broadcast_to(t, (B, 1)).astype(dtype)

    tile = _choose_tile(B, tile_b, sub)
    Bp = _round_up(B, tile)
    grid = (Bp // tile,)
    nsub = tile // sub

    # feature-major (lane-dense) input slab: rows = [t; x^T; zero pad], lanes = batch
    slab = jnp.pad(jnp.concatenate([t, x], axis=-1),
                   ((0, Bp - B), (0, SLAB_ROWS - D_IN))).T     # (SLAB_ROWS, Bp)

    outT = pl.pallas_call(
        _make_kernel(nsub, sub),
        out_shape=jax.ShapeDtypeStruct((D_OUT, Bp), dtype),
        grid=grid,
        in_specs=[
            pl.BlockSpec((SLAB_ROWS, tile), lambda i: (0, i)),   # input slab (streamed)
            pl.BlockSpec(w0s.shape, lambda i: (0, 0)),           # weights: constant
            pl.BlockSpec(b0.shape, lambda i: (0, 0)),            # index -> DMA'd once
            pl.BlockSpec(w1t.shape, lambda i: (0, 0)),
            pl.BlockSpec(b1.shape, lambda i: (0, 0)),
            pl.BlockSpec(w2t.shape, lambda i: (0, 0)),
            pl.BlockSpec(b2.shape, lambda i: (0, 0)),
        ],
        out_specs=pl.BlockSpec((D_OUT, tile), lambda i: (0, i)),
        compiler_params=pltpu.CompilerParams(
            dimension_semantics=("parallel",)),
    )(slab, w0s, b0, w1t, b1, w2t, b2)

    return outT[:, :B].T                                        # back to (B, D_OUT)


# --------------------------- deterministic params ---------------------------
def init_params(key):
    """PyTorch-Linear-style uniform(-1/sqrt(fan_in), 1/sqrt(fan_in)) init."""
    dims = (D_IN,) + HIDDEN + (D_OUT,)
    params = []
    for fan_in, fan_out in zip(dims[:-1], dims[1:]):
        key, kw, kb = jax.random.split(key, 3)
        bound = 1.0 / jnp.sqrt(float(fan_in))
        w = jax.random.uniform(kw, (fan_in, fan_out), jnp.float32, -bound, bound)
        b = jax.random.uniform(kb, (1, fan_out), jnp.float32, -bound, bound)
        params += [w, b]
    return tuple(params)


# --------------------------- pure-JAX reference ------------------------------
def reference_forward(t, x, params):
    if t.ndim != x.ndim:
        t = jnp.reshape(t, (-1, 1))
    t = jnp.broadcast_to(t, x[..., :1].shape)
    z = jnp.concatenate([t, x], axis=-1)
    w0, b0, w1, b1, w2, b2 = params
    h = jnp.maximum(z @ w0 + b0, 0.0)
    h = jnp.maximum(h @ w1 + b1, 0.0)
    v = h @ w2 + b2
    guide = -x + 0.1 * v
    return v + guide * (GUIDE_SCALE * GUIDE_SCHED)


# ---------------------------------- main -------------------------------------
if __name__ == "__main__":
    key = jax.random.PRNGKey(0)
    kp, kx, kt = jax.random.split(key, 3)

    params = init_params(kp)
    packed = pack_params(params)

    B = 2048                  # 2 grid steps x 1024 lanes (both v7x cores busy)
    x = jax.random.normal(kx, (B, D_X), jnp.float32)
    t = jax.random.uniform(kt, (B, 1), jnp.float32)

    # f32 path: exact check vs pure-JAX reference.
    out = guided_mlp_forward(t, x, packed)
    out = jax.block_until_ready(out)
    ref = reference_forward(t, x, params)
    assert out.shape == (B, D_OUT)
    assert jnp.allclose(out, ref, atol=1e-5, rtol=1e-5), "f32 mismatch vs reference"

    # bf16 I/O path (halves HBM traffic; in-kernel compute stays f32).
    out_bf = guided_mlp_forward(t.astype(jnp.bfloat16), x.astype(jnp.bfloat16), packed)
    out_bf = jax.block_until_ready(out_bf)
    assert out_bf.dtype == jnp.bfloat16
    assert jnp.allclose(out_bf.astype(jnp.float32), ref, atol=5e-2, rtol=5e-2), \
        "bf16 mismatch vs reference"

    print("KERNEL_OK")
</pallas_src>

<mosaic_0001>
module attributes {stable_mosaic.version = 11 : i64} {
  func.func @kernel(%arg0: i32, %arg1: memref<8x1024xf32, #tpu.memory_space<vmem>>, %arg2: memref<32x8xf32, #tpu.memory_space<vmem>>, %arg3: memref<32x1xf32, #tpu.memory_space<vmem>>, %arg4: memref<32x32xf32, #tpu.memory_space<vmem>>, %arg5: memref<32x1xf32, #tpu.memory_space<vmem>>, %arg6: memref<4x32xf32, #tpu.memory_space<vmem>>, %arg7: memref<4x1xf32, #tpu.memory_space<vmem>>, %arg8: memref<4x1024xf32, #tpu.memory_space<vmem>>) attributes {dimension_semantics = [#tpu.dimension_semantics<parallel>], iteration_bounds = array<i64: 2>, scalar_prefetch = 0 : i64, scratch_operands = 0 : i64, tpu.core_type = #tpu.core_type<tc>, window_params = [{transform_indices = @transform_0, window_bounds = array<i64: 8, 1024>}, {pipeline_mode = #tpu.pipeline_mode<synchronous>, transform_indices = @transform_1, window_bounds = array<i64: 32, 8>}, {pipeline_mode = #tpu.pipeline_mode<synchronous>, transform_indices = @transform_2, window_bounds = array<i64: 32, 1>}, {pipeline_mode = #tpu.pipeline_mode<synchronous>, transform_indices = @transform_3, window_bounds = array<i64: 32, 32>}, {pipeline_mode = #tpu.pipeline_mode<synchronous>, transform_indices = @transform_4, window_bounds = array<i64: 32, 1>}, {pipeline_mode = #tpu.pipeline_mode<synchronous>, transform_indices = @transform_5, window_bounds = array<i64: 4, 32>}, {pipeline_mode = #tpu.pipeline_mode<synchronous>, transform_indices = @transform_6, window_bounds = array<i64: 4, 1>}, {transform_indices = @transform_7, window_bounds = array<i64: 4, 1024>}]} {
    %c0 = arith.constant 0 : index
    %c0_0 = arith.constant 0 : index
    %0 = vector.load %arg2[%c0, %c0_0] : memref<32x8xf32, #tpu.memory_space<vmem>>, vector<32x8xf32>
    %c0_1 = arith.constant 0 : index
    %c0_2 = arith.constant 0 : index
    %1 = vector.load %arg4[%c0_1, %c0_2] : memref<32x32xf32, #tpu.memory_space<vmem>>, vector<32x32xf32>
    %c0_3 = arith.constant 0 : index
    %c0_4 = arith.constant 0 : index
    %2 = vector.load %arg6[%c0_3, %c0_4] : memref<4x32xf32, #tpu.memory_space<vmem>>, vector<4x32xf32>
    %c0_5 = arith.constant 0 : index
    %c0_6 = arith.constant 0 : index
    %3 = vector.load %arg3[%c0_5, %c0_6] : memref<32x1xf32, #tpu.memory_space<vmem>>, vector<32x1xf32>
    %4 = vector.shape_cast %3 : vector<32x1xf32> to vector<32x1xf32>
    %5 = vector.broadcast %4 : vector<32x1xf32> to vector<32x512xf32>
    %c0_7 = arith.constant 0 : index
    %c0_8 = arith.constant 0 : index
    %6 = vector.load %arg5[%c0_7, %c0_8] : memref<32x1xf32, #tpu.memory_space<vmem>>, vector<32x1xf32>
    %7 = vector.shape_cast %6 : vector<32x1xf32> to vector<32x1xf32>
    %8 = vector.broadcast %7 : vector<32x1xf32> to vector<32x512xf32>
    %c0_9 = arith.constant 0 : index
    %c0_10 = arith.constant 0 : index
    %9 = vector.load %arg7[%c0_9, %c0_10] : memref<4x1xf32, #tpu.memory_space<vmem>>, vector<4x1xf32>
    %10 = vector.shape_cast %9 : vector<4x1xf32> to vector<4x1xf32>
    %11 = vector.broadcast %10 : vector<4x1xf32> to vector<4x512xf32>
    %c0_i32 = arith.constant 0 : i32
    %c2_i32 = arith.constant 2 : i32
    %12 = arith.addi %c0_i32, %c2_i32 : i32
    %c1_i32 = arith.constant 1 : i32
    scf.for %arg9 = %c0_i32 to %12 step %c1_i32  : i32 {
      %c1_i32_12 = arith.constant 1 : i32
      %13 = arith.muli %arg9, %c1_i32_12 : i32
      %c0_i32_13 = arith.constant 0 : i32
      %14 = arith.addi %c0_i32_13, %13 : i32
      %c512_i32 = arith.constant 512 : i32
      %15 = arith.muli %14, %c512_i32 : i32
      %16 = tpu.assume_multiple %15, 512 : i32
      %c0_14 = arith.constant 0 : index
      %17 = arith.index_cast %16 : i32 to index
      %18 = vector.load %arg1[%c0_14, %17] : memref<8x1024xf32, #tpu.memory_space<vmem>>, vector<8x512xf32>
      %cst = arith.constant dense<0.000000e+00> : vector<32x512xf32>
      %19 = tpu.matmul %0, %18, %cst {dimension_numbers = #tpu.dot_dimension_numbers<[1], [0], [0], [1], [0, 0, 1, 1], [], []>} : vector<32x8xf32>, vector<8x512xf32>, vector<32x512xf32> -> vector<32x512xf32>
      %20 = arith.addf %19, %5 : vector<32x512xf32>
      %cst_15 = arith.constant 0.000000e+00 : f32
      %21 = vector.broadcast %cst_15 : f32 to vector<32x512xf32>
      %22 = arith.maximumf %20, %21 : vector<32x512xf32>
      %cst_16 = arith.constant dense<0.000000e+00> : vector<32x512xf32>
      %23 = tpu.matmul %1, %22, %cst_16 {dimension_numbers = #tpu.dot_dimension_numbers<[1], [0], [0], [1], [0, 0, 1, 1], [], []>} : vector<32x32xf32>, vector<32x512xf32>, vector<32x512xf32> -> vector<32x512xf32>
      %24 = arith.addf %23, %8 : vector<32x512xf32>
      %cst_17 = arith.constant 0.000000e+00 : f32
      %25 = vector.broadcast %cst_17 : f32 to vector<32x512xf32>
      %26 = arith.maximumf %24, %25 : vector<32x512xf32>
      %cst_18 = arith.constant dense<0.000000e+00> : vector<4x512xf32>
      %27 = tpu.matmul %2, %26, %cst_18 {dimension_numbers = #tpu.dot_dimension_numbers<[1], [0], [0], [1], [0, 0, 1, 1], [], []>} : vector<4x32xf32>, vector<32x512xf32>, vector<4x512xf32> -> vector<4x512xf32>
      %28 = arith.addf %27, %11 : vector<4x512xf32>
      %29 = vector.extract_strided_slice %18 {offsets = [1, 0], sizes = [4, 512], strides = [1, 1]} : vector<8x512xf32> to vector<4x512xf32>
      %cst_19 = arith.constant -5.000000e-01 : f32
      %30 = vector.broadcast %cst_19 : f32 to vector<4x512xf32>
      %31 = arith.mulf %30, %29 : vector<4x512xf32>
      %32 = arith.addf %28, %31 : vector<4x512xf32>
      %c0_20 = arith.constant 0 : index
      %33 = arith.index_cast %16 : i32 to index
      %34 = vector.load %arg8[%c0_20, %33] : memref<4x1024xf32, #tpu.memory_space<vmem>>, vector<4x512xf32>
      tpu.vector_store %arg8[%c0_20, %33], %32 {strides = array<i32>} : memref<4x1024xf32, #tpu.memory_space<vmem>>, vector<4x512xf32>,
    }
    %c2_i32_11 = arith.constant 2 : i32
    return
  }
  func.func @transform_0(%arg0: i32) -> (i32, i32) {
    %c0_i32 = arith.constant 0 : i32
    %c0_i32_0 = arith.constant 0 : i32
    return %c0_i32, %arg0 : i32, i32
  }
  func.func @transform_1(%arg0: i32) -> (i32, i32) {
    %c0_i32 = arith.constant 0 : i32
    %c0_i32_0 = arith.constant 0 : i32
    %c0_i32_1 = arith.constant 0 : i32
    return %c0_i32, %c0_i32_0 : i32, i32
  }
  func.func @transform_2(%arg0: i32) -> (i32, i32) {
    %c0_i32 = arith.constant 0 : i32
    %c0_i32_0 = arith.constant 0 : i32
    %c0_i32_1 = arith.constant 0 : i32
    return %c0_i32, %c0_i32_0 : i32, i32
  }
  func.func @transform_3(%arg0: i32) -> (i32, i32) {
    %c0_i32 = arith.constant 0 : i32
    %c0_i32_0 = arith.constant 0 : i32
    %c0_i32_1 = arith.constant 0 : i32
    return %c0_i32, %c0_i32_0 : i32, i32
  }
  func.func @transform_4(%arg0: i32) -> (i32, i32) {
    %c0_i32 = arith.constant 0 : i32
    %c0_i32_0 = arith.constant 0 : i32
    %c0_i32_1 = arith.constant 0 : i32
    return %c0_i32, %c0_i32_0 : i32, i32
  }
  func.func @transform_5(%arg0: i32) -> (i32, i32) {
    %c0_i32 = arith.constant 0 : i32
    %c0_i32_0 = arith.constant 0 : i32
    %c0_i32_1 = arith.constant 0 : i32
    return %c0_i32, %c0_i32_0 : i32, i32
  }
  func.func @transform_6(%arg0: i32) -> (i32, i32) {
    %c0_i32 = arith.constant 0 : i32
    %c0_i32_0 = arith.constant 0 : i32
    %c0_i32_1 = arith.constant 0 : i32
    return %c0_i32, %c0_i32_0 : i32, i32
  }
  func.func @transform_7(%arg0: i32) -> (i32, i32) {
    %c0_i32 = arith.constant 0 : i32
    %c0_i32_0 = arith.constant 0 : i32
    return %c0_i32, %arg0 : i32, i32
  }
}

</mosaic_0001>

<llo_original>
// kernel: tpu_custom_call.1
$region0: #{tpu_custom_call.1}
  #allocation0 [shape = 'u32[]', space=smem, size = 0x4, offset = 0x4, fixed_abs, tag = 'smem constant byte address 0x4 - core index']
  #allocation1 [shape = 'u32[144,128]{1,0:T(1,128)}', space=vmem, size = 0x12000, scoped, tag = 'internal scratch']
  %s0 = inlined_call_operand.hbm [shape: f32[8,2048], index: 0, kind: input, shape index: {}]
  %s1 = inlined_call_operand.vmem [shape: f32[32,8], index: 1, kind: input, shape index: {}]
  %s2 = inlined_call_operand.vmem [shape: f32[32,1], index: 2, kind: input, shape index: {}]
  %s3 = inlined_call_operand.vmem [shape: f32[32,32], index: 3, kind: input, shape index: {}]
  %s4 = inlined_call_operand.vmem [shape: f32[32,1], index: 4, kind: input, shape index: {}]
  %s5 = inlined_call_operand.vmem [shape: f32[4,32], index: 5, kind: input, shape index: {}]
  %s6 = inlined_call_operand.vmem [shape: f32[4,1], index: 6, kind: input, shape index: {}]
  %s7 = inlined_call_operand.hbm [shape: f32[4,2048], index: 7, kind: output, shape index: {}]
  %s8 = sld [smem:[#allocation0]]
  $region72: #{tpu_custom_call.1} parent=0
    _
  %s10 = ssub.s32 1, %s8
  %s11 = scalar_select 0, %s10, %s8
  $region1: #{tpu_custom_call.1} parent=0
    #allocation2 [shape = 'u8[65536]{0}', space=vmem, size = 0x10000, scoped, tag = 'input window, operand 0']
    #allocation3 [shape = 's32[2]{0}', space=sflag, size = 0x8, scoped, tag = 'scoped memory for tpu_custom_call.1']
    #allocation4 [shape = 's32[2]{0}', space=sflag, size = 0x8, scoped, tag = 'scoped memory for tpu_custom_call.1']
    #allocation5 [shape = 'u8[32768]{0}', space=vmem, size = 0x8000, scoped, tag = 'output window, operand 0']
    %12 = vsyncpa [#allocation3], 0
    %s13 = scalar_lea.sflag [#allocation3], 1
    %14 = vsyncpa %s13, 0
    %15 = vsyncpa [#allocation4], 0
    %s16 = scalar_lea.sflag [#allocation4], 1
    %17 = vsyncpa %s16, 0
    loop: start=0, step=1, limit=4
    $region2: #{tpu_custom_call.1} parent=1 // loop_pre_header
      _
    $region3: #{tpu_custom_call.1} parent=1 // loop_header
      %s19 = sphi 0, %s23
      %p20 = scmp.ge.s32.totalorder %s19, 4
      %s29 = sphi 0, %s31
      %s32 = sphi 0, %s29
      %s33 = sphi 0, %s32
      %s49 = sphi 0, %s33
      %s53 = sphi 0, %s53
      %s55 = sphi 0, %s53
      %s56 = sphi 0, %s55
      %s70 = sphi 0, %s56
      %s74 = sphi 0, %s74
      %s76 = sphi 0, %s74
      %s77 = sphi 0, %s76
      %s91 = sphi 0, %s77
      %s95 = sphi 0, %s95
      %s97 = sphi 0, %s95
      %s98 = sphi 0, %s97
      %s112 = sphi 0, %s98
      %s116 = sphi 0, %s116
      %s118 = sphi 0, %s116
      %s119 = sphi 0, %s118
      %s133 = sphi 0, %s119
      %s137 = sphi 0, %s137
      %s139 = sphi 0, %s137
      %s140 = sphi 0, %s139
      %s154 = sphi 0, %s140
      %s158 = sphi 0, %s158
      %s160 = sphi 0, %s158
      %s161 = sphi 0, %s160
      %s175 = sphi 0, %s161
      %s181 = sphi 0, %s183
      %s184 = sphi 0, %s181
      %s185 = sphi 0, %s184
      %s201 = sphi 0, %s185
    $region4: #{tpu_custom_call.1} parent=1 // loop_header_branch
      %22 = sbr.rel (%p20) target = $region8
    $region5: #{tpu_custom_call.1} parent=1 // loop_body
      %s24 = ssub.s32 %s19, 1
      %s25 = ssub.s32 %s19, 2
      %s26 = sadd.s32 %s19, 1
      %s27 = ssub.s32 %s19, %s26
      %p28 = scmp.eq.s32.totalorder %s27, 0
      %s30 = sadd.s32 %s29, 1
      %s31 = scalar_select %p28, %s29, %s30
      %p34 = pneg %p28
      %p35 = scmp.eq.s32.totalorder %s19, 1
      %p36 = por %p34, %p35
      %p37 = scmp.ne.s32.totalorder %s29, %s32
      %p38 = scmp.eq.s32.totalorder %s19, 0
      %p39 = por %p37, %p38
      %p40 = scmp.ne.s32.totalorder %s29, %s32
      %p41 = scmp.eq.s32.totalorder %s24, 1
      %p42 = por %p40, %p41
      %p43 = scmp.ne.s32.totalorder %s32, %s33
      %p44 = scmp.eq.s32.totalorder %s24, 0
      %p45 = por %p43, %p44
      %p46 = scmp.ne.s32.totalorder %s32, %s33
      %p47 = scmp.eq.s32.totalorder %s25, 1
      %p48 = por %p46, %p47
      %p50 = scmp.ne.s32.totalorder %s33, %s49
      %p51 = scmp.eq.s32.totalorder %s25, 0
      %p52 = por %p50, %p51
      %s54 = sadd.s32 %s53, 1
      %p57 = scmp.eq.s32.totalorder %s19, 1
      %p58 = scmp.ne.s32.totalorder %s53, %s55
      %p59 = scmp.eq.s32.totalorder %s19, 0
      %p60 = por %p58, %p59
      %p61 = scmp.ne.s32.totalorder %s53, %s55
      %p62 = scmp.eq.s32.totalorder %s24, 1
      %p63 = por %p61, %p62
      %p64 = scmp.ne.s32.totalorder %s55, %s56
      %p65 = scmp.eq.s32.totalorder %s24, 0
      %p66 = por %p64, %p65
      %p67 = scmp.ne.s32.totalorder %s55, %s56
      %p68 = scmp.eq.s32.totalorder %s25, 1
      %p69 = por %p67, %p68
      %p71 = scmp.ne.s32.totalorder %s56, %s70
      %p72 = scmp.eq.s32.totalorder %s25, 0
      %p73 = por %p71, %p72
      %s75 = sadd.s32 %s74, 1
      %p78 = scmp.eq.s32.totalorder %s19, 1
      %p79 = scmp.ne.s32.totalorder %s74, %s76
      %p80 = scmp.eq.s32.totalorder %s19, 0
      %p81 = por %p79, %p80
      %p82 = scmp.ne.s32.totalorder %s74, %s76
      %p83 = scmp.eq.s32.totalorder %s24, 1
      %p84 = por %p82, %p83
      %p85 = scmp.ne.s32.totalorder %s76, %s77
      %p86 = scmp.eq.s32.totalorder %s24, 0
      %p87 = por %p85, %p86
      %p88 = scmp.ne.s32.totalorder %s76, %s77
      %p89 = scmp.eq.s32.totalorder %s25, 1
      %p90 = por %p88, %p89
      %p92 = scmp.ne.s32.totalorder %s77, %s91
      %p93 = scmp.eq.s32.totalorder %s25, 0
      %p94 = por %p92, %p93
      %s96 = sadd.s32 %s95, 1
      %p99 = scmp.eq.s32.totalorder %s19, 1
      %p100 = scmp.ne.s32.totalorder %s95, %s97
      %p101 = scmp.eq.s32.totalorder %s19, 0
      %p102 = por %p100, %p101
      %p103 = scmp.ne.s32.totalorder %s95, %s97
      %p104 = scmp.eq.s32.totalorder %s24, 1
      %p105 = por %p103, %p104
      %p106 = scmp.ne.s32.totalorder %s97, %s98
      %p107 = scmp.eq.s32.totalorder %s24, 0
      %p108 = por %p106, %p107
      %p109 = scmp.ne.s32.totalorder %s97, %s98
      %p110 = scmp.eq.s32.totalorder %s25, 1
      %p111 = por %p109, %p110
      %p113 = scmp.ne.s32.totalorder %s98, %s112
      %p114 = scmp.eq.s32.totalorder %s25, 0
      %p115 = por %p113, %p114
      %s117 = sadd.s32 %s116, 1
      %p120 = scmp.eq.s32.totalorder %s19, 1
      %p121 = scmp.ne.s32.totalorder %s116, %s118
      %p122 = scmp.eq.s32.totalorder %s19, 0
      %p123 = por %p121, %p122
      %p124 = scmp.ne.s32.totalorder %s116, %s118
      %p125 = scmp.eq.s32.totalorder %s24, 1
      %p126 = por %p124, %p125
      %p127 = scmp.ne.s32.totalorder %s118, %s119
      %p128 = scmp.eq.s32.totalorder %s24, 0
      %p129 = por %p127, %p128
      %p130 = scmp.ne.s32.totalorder %s118, %s119
      %p131 = scmp.eq.s32.totalorder %s25, 1
      %p132 = por %p130, %p131
      %p134 = scmp.ne.s32.totalorder %s119, %s133
      %p135 = scmp.eq.s32.totalorder %s25, 0
      %p136 = por %p134, %p135
      %s138 = sadd.s32 %s137, 1
      %p141 = scmp.eq.s32.totalorder %s19, 1
      %p142 = scmp.ne.s32.totalorder %s137, %s139
      %p143 = scmp.eq.s32.totalorder %s19, 0
      %p144 = por %p142, %p143
      %p145 = scmp.ne.s32.totalorder %s137, %s139
      %p146 = scmp.eq.s32.totalorder %s24, 1
      %p147 = por %p145, %p146
      %p148 = scmp.ne.s32.totalorder %s139, %s140
      %p149 = scmp.eq.s32.totalorder %s24, 0
      %p150 = por %p148, %p149
      %p151 = scmp.ne.s32.totalorder %s139, %s140
      %p152 = scmp.eq.s32.totalorder %s25, 1
      %p153 = por %p151, %p152
      %p155 = scmp.ne.s32.totalorder %s140, %s154
      %p156 = scmp.eq.s32.totalorder %s25, 0
      %p157 = por %p155, %p156
      %s159 = sadd.s32 %s158, 1
      %p162 = scmp.eq.s32.totalorder %s19, 1
      %p163 = scmp.ne.s32.totalorder %s158, %s160
      %p164 = scmp.eq.s32.totalorder %s19, 0
      %p165 = por %p163, %p164
      %p166 = scmp.ne.s32.totalorder %s158, %s160
      %p167 = scmp.eq.s32.totalorder %s24, 1
      %p168 = por %p166, %p167
      %p169 = scmp.ne.s32.totalorder %s160, %s161
      %p170 = scmp.eq.s32.totalorder %s24, 0
      %p171 = por %p169, %p170
      %p172 = scmp.ne.s32.totalorder %s160, %s161
      %p173 = scmp.eq.s32.totalorder %s25, 1
      %p174 = por %p172, %p173
      %p176 = scmp.ne.s32.totalorder %s161, %s175
      %p177 = scmp.eq.s32.totalorder %s25, 0
      %p178 = por %p176, %p177
      %s179 = ssub.s32 %s19, %s26
      %p180 = scmp.eq.s32.totalorder %s179, 0
      %s182 = sadd.s32 %s181, 1
      %s183 = scalar_select %p180, %s181, %s182
      %p186 = pneg %p180
      %p187 = scmp.eq.s32.totalorder %s19, 1
      %p188 = por %p186, %p187
      %p189 = scmp.ne.s32.totalorder %s181, %s184
      %p190 = scmp.eq.s32.totalorder %s19, 0
      %p191 = por %p189, %p190
      %p192 = scmp.ne.s32.totalorder %s181, %s184
      %p193 = scmp.eq.s32.totalorder %s24, 1
      %p194 = por %p192, %p193
      %p195 = scmp.ne.s32.totalorder %s184, %s185
      %p196 = scmp.eq.s32.totalorder %s24, 0
      %p197 = por %p195, %p196
      %p198 = scmp.ne.s32.totalorder %s184, %s185
      %p199 = scmp.eq.s32.totalorder %s25, 1
      %p200 = por %p198, %p199
      %p202 = scmp.ne.s32.totalorder %s185, %s201
      %p203 = scmp.eq.s32.totalorder %s25, 0
      %p204 = por %p202, %p203
      %p205 = scmp.le.s32.totalorder 1, %s19
      %p206 = scmp.lt.s32.totalorder %s19, 3
      %p207 = pnand %p205, %p206
      %p208 = pneg %p207
      // Predicated region
      $region9: #{tpu_custom_call.1} parent=5 // pred_check
        _
      $region10: #{tpu_custom_call.1} parent=5 // pred_check_branch
        %210 = sbr.rel (%p207) target = $region12
      $region11: #{tpu_custom_call.1} parent=5 // pred_region
        %s211 = ssub.s32 %s19, 1
        // Predicated region
        $region13: #{tpu_custom_call.1} parent=11 // pred_check
          %p212 = pneg %p66
        $region14: #{tpu_custom_call.1} parent=11 // pred_check_branch
          %214 = sbr.rel (%p212) target = $region16
        $region15: #{tpu_custom_call.1} parent=11 // pred_region
          _
        $region16: #{tpu_custom_call.1} parent=11 // pred_fallthru
          _
        // Predicated region
        $region17: #{tpu_custom_call.1} parent=11 // pred_check
          %p215 = pneg %p87
        $region18: #{tpu_custom_call.1} parent=11 // pred_check_branch
          %217 = sbr.rel (%p215) target = $region20
        $region19: #{tpu_custom_call.1} parent=11 // pred_region
          _
        $region20: #{tpu_custom_call.1} parent=11 // pred_fallthru
          _
        // Predicated region
        $region21: #{tpu_custom_call.1} parent=11 // pred_check
          %p218 = pneg %p108
        $region22: #{tpu_custom_call.1} parent=11 // pred_check_branch
          %220 = sbr.rel (%p218) target = $region24
        $region23: #{tpu_custom_call.1} parent=11 // pred_region
          _
        $region24: #{tpu_custom_call.1} parent=11 // pred_fallthru
          _
        // Predicated region
        $region25: #{tpu_custom_call.1} parent=11 // pred_check
          %p221 = pneg %p129
        $region26: #{tpu_custom_call.1} parent=11 // pred_check_branch
          %223 = sbr.rel (%p221) target = $region28
        $region27: #{tpu_custom_call.1} parent=11 // pred_region
          _
        $region28: #{tpu_custom_call.1} parent=11 // pred_fallthru
          _
        // Predicated region
        $region29: #{tpu_custom_call.1} parent=11 // pred_check
          %p224 = pneg %p150
        $region30: #{tpu_custom_call.1} parent=11 // pred_check_branch
          %226 = sbr.rel (%p224) target = $region32
        $region31: #{tpu_custom_call.1} parent=11 // pred_region
          _
        $region32: #{tpu_custom_call.1} parent=11 // pred_fallthru
          _
        // Predicated region
        $region33: #{tpu_custom_call.1} parent=11 // pred_check
          %p227 = pneg %p171
        $region34: #{tpu_custom_call.1} parent=11 // pred_check_branch
          %229 = sbr.rel (%p227) target = $region36
        $region35: #{tpu_custom_call.1} parent=11 // pred_region
          _
        $region36: #{tpu_custom_call.1} parent=11 // pred_fallthru
          _
      $region12: #{tpu_custom_call.1} parent=5 // pred_fallthru
        _
      %p230 = scmp.lt.s32.totalorder %s19, 2
      // Predicated region
      $region37: #{tpu_custom_call.1} parent=5 // pred_check
        %p231 = pneg %p230
      $region38: #{tpu_custom_call.1} parent=5 // pred_check_branch
        %233 = sbr.rel (%p231) target = $region40
      $region39: #{tpu_custom_call.1} parent=5 // pred_region
        // Predicated region
        $region41: #{tpu_custom_call.1} parent=39 // pred_check
          %p234 = pneg %p39
        $region42: #{tpu_custom_call.1} parent=39 // pred_check_branch
          %236 = sbr.rel (%p234) target = $region44
        $region43: #{tpu_custom_call.1} parent=39 // pred_region
          %s237 = sand.u32 %s29, 1
          %s238 = scalar_lea.sflag [#allocation3], %s237
          %s239 = sand.u32 %s29, 1
          %s240 = smul.addr %s239, 64
          %s241 = scalar_lea.vmem [#allocation2], %s240
          %s242 = smul.u32 8, %s19
          %s244 = ssub.s32 1024, 1024
          %245 = vsyncadd %s238, %s244
          %s246 = smul.addr %s242, 128
          %s247 = scalar_lea.hbm %s0, %s246
          %s249 = sshll.u32 %s241, 4
          %s250 = int_to_ptr.vmem [resolvable:$true] %s249
          %252 = dma.hbm_to_vmem [thread:$0]  %s247, 1024, %s250, %s238
        $region44: #{tpu_custom_call.1} parent=39 // pred_fallthru
          _
      $region40: #{tpu_custom_call.1} parent=5 // pred_fallthru
        _
      %p253 = scmp.le.s32.totalorder 1, %s19
      %p254 = scmp.lt.s32.totalorder %s19, 3
      %p255 = pnand %p253, %p254
      %p256 = pneg %p255
      // Predicated region
      $region45: #{tpu_custom_call.1} parent=5 // pred_check
        _
      $region46: #{tpu_custom_call.1} parent=5 // pred_check_branch
        %258 = sbr.rel (%p255) target = $region48
      $region47: #{tpu_custom_call.1} parent=5 // pred_region
        %s259 = ssub.s32 %s19, 1
        %s260 = sand.u32 %s32, 1
        %s261 = scalar_lea.sflag [#allocation3], %s260
        %s262 = sand.u32 %s32, 1
        %s263 = smul.addr %s262, 64
        %s264 = scalar_lea.vmem [#allocation2], %s263
        // Predicated region
        $region49: #{tpu_custom_call.1} parent=47 // pred_check
          %p265 = pneg %p45
        $region50: #{tpu_custom_call.1} parent=47 // pred_check_branch
          %267 = sbr.rel (%p265) target = $region52
        $region51: #{tpu_custom_call.1} parent=47 // pred_region
          %268 = dma.done %s261, 1024
        $region52: #{tpu_custom_call.1} parent=47 // pred_fallthru
          _
        %s269 = sand.u32 %s32, 1
        %s270 = scalar_lea.sflag [#allocation3], %s269
        %s271 = sand.u32 %s32, 1
        %s272 = smul.addr %s271, 64
        %s273 = scalar_lea.vmem [#allocation2], %s272
        %p274 = pneg %p45
        %p275 = pneg %p42
        %p276 = pneg %p66
        %p277 = pneg %p63
        %p278 = pneg %p87
        %p279 = pneg %p84
        %p280 = pneg %p108
        %p281 = pneg %p105
        %p282 = pneg %p129
        %p283 = pneg %p126
        %p284 = pneg %p150
        %p285 = pneg %p147
        %p286 = pneg %p171
        %p287 = pneg %p168
        %p288 = pneg %p197
        %p289 = pneg %p194
        %s290 = sand.u32 %s184, 1
        %s291 = scalar_lea.sflag [#allocation4], %s290
        %s292 = sand.u32 %s184, 1
        %s293 = smul.addr %s292, 32
        %s294 = scalar_lea.vmem [#allocation5], %s293
        %s295 = smul.u32 8, %s24
        %s296 = smul.u32 8, %s24
        %v297 = vld [vmem:[%s1] sm:$0xff]
        %v298 = vld [vmem:[%s1 + $0x8] sm:$0xff]
        %v299 = vld [vmem:[%s1 + $0x10] sm:$0xff]
        %v300 = vld [vmem:[%s1 + $0x18] sm:$0xff]
        %v301 = vld [vmem:[%s3] sm:$0xff]
        %v302 = vld [vmem:[%s3 + $0x8] sm:$0xff]
        %v303 = vld [vmem:[%s3 + $0x10] sm:$0xff]
        %v304 = vld [vmem:[%s3 + $0x18] sm:$0xff]
        %v305 = vld [vmem:[%s5] sm:$0xf]
        %v306 = vld [vmem:[%s2] sm:$0xff]
        %v307 = vld [vmem:[%s2 + $0x8] sm:$0xff]
        %v308 = vld [vmem:[%s2 + $0x10] sm:$0xff]
        %v309 = vld [vmem:[%s2 + $0x18] sm:$0xff]
        %311 = vset.pattern.permute.xlu0 0
        %312 = vperm.xlu0 %311, %v306
        %v313 = vpop.permute.xlu0 %312
        %316 = vset.pattern.permute.xlu0 0
        %317 = vperm.xlu0 %316, %v307
        %v318 = vpop.permute.xlu0 %317
        %321 = vset.pattern.permute.xlu0 0
        %322 = vperm.xlu0 %321, %v308
        %v323 = vpop.permute.xlu0 %322
        %326 = vset.pattern.permute.xlu0 0
        %327 = vperm.xlu0 %326, %v309
        %v328 = vpop.permute.xlu0 %327
        %v330 = vld [vmem:[%s4] sm:$0xff]
        %v331 = vld [vmem:[%s4 + $0x8] sm:$0xff]
        %v332 = vld [vmem:[%s4 + $0x10] sm:$0xff]
        %v333 = vld [vmem:[%s4 + $0x18] sm:$0xff]
        %335 = vset.pattern.permute.xlu0 0
        %336 = vperm.xlu0 %335, %v330
        %v337 = vpop.permute.xlu0 %336
        %340 = vset.pattern.permute.xlu0 0
        %341 = vperm.xlu0 %340, %v331
        %v342 = vpop.permute.xlu0 %341
        %345 = vset.pattern.permute.xlu0 0
        %346 = vperm.xlu0 %345, %v332
        %v347 = vpop.permute.xlu0 %346
        %350 = vset.pattern.permute.xlu0 0
        %351 = vperm.xlu0 %350, %v333
        %v352 = vpop.permute.xlu0 %351
        %v354 = vld [vmem:[%s6] sm:$0xf]
        %356 = vset.pattern.permute.xlu0 0
        %357 = vperm.xlu0 %356, %v354
        %v358 = vpop.permute.xlu0 %357
        loop: start=0, step=1, limit=2
        $region53: #{tpu_custom_call.1} parent=47 // loop_pre_header
          _
        $region54: #{tpu_custom_call.1} parent=47 // loop_header
          %s361 = sphi 0, %s365
          %p362 = scmp.ge.s32.totalorder %s361, 2
        $region55: #{tpu_custom_call.1} parent=47 // loop_header_branch
          %364 = sbr.rel (%p362) target = $region59
        $region56: #{tpu_custom_call.1} parent=47 // loop_body
          %s366 = smul.u32 %s361, 512
          %s367 = sshra.s32 %s366, 7
          %s368 = sand.u32 %s366, 127
          %s369 = smul.addr %s367, 8
          %s370 = scalar_lea.vmem %s264, %s369 [#allocation2]
          %v371 = vld [vmem:[%s370] sm:$0xff]
          %v372 = vld [vmem:[%s370 + $0x8] sm:$0xff]
          %v373 = vld [vmem:[%s370 + $0x10] sm:$0xff]
          %v374 = vld [vmem:[%s370 + $0x18] sm:$0xff]
          %vm375 = vcmask 64512
          %v377 = vsel %vm375, %v297, 0
          %v380 = vsel %vm375, %v298, 0
          %v383 = vsel %vm375, %v299, 0
          %v386 = vsel %vm375, %v300, 0
          %388 = vmatprep.subr.mxu0 0.0
          %389 = vmatpush1.msra.mxu0 0.0
          %390 = vmatprep.subr.mxu0 0.0
          %391 = vmatpush1.msra.mxu0 0.0
          %392 = vmatprep.subr.mxu0 0.0
          %393 = vmatpush1.msra.mxu0 0.0
          %394 = vmatprep.subr.mxu0 0.0
          %395 = vmatpush1.msra.mxu0 0.0
          %396 = vmatprep.subr.mxu0 0.0
          %397 = vmatpush1.msra.mxu0 0.0
          %398 = vmatprep.subr.mxu0 0.0
          %399 = vmatpush1.msra.mxu0 0.0
          %400 = vmatprep.subr.mxu0 0.0
          %401 = vmatpush1.msra.mxu0 0.0
          %402 = vmatprep.subr.mxu0 0.0
          %403 = vmatpush1.msra.mxu0 0.0
          %404 = vmatprep.subr.mxu0 0.0
          %405 = vmatpush1.msra.mxu0 0.0
          %406 = vmatprep.subr.mxu0 0.0
          %407 = vmatpush1.msra.mxu0 0.0
          %408 = vmatprep.subr.mxu0 0.0
          %409 = vmatpush1.msra.mxu0 0.0
          %410 = vmatprep.subr.mxu0 0.0
          %411 = vmatpush1.msra.mxu0 0.0
          %412 = vmatprep.subr.mxu0 0.0
          %413 = vmatpush1.msra.mxu0 0.0
          %414 = vmatprep.subr.mxu0 0.0
          %415 = vmatpush1.msra.mxu0 0.0
          %416 = vmatprep.subr.mxu0 0.0
          %417 = vmatpush1.msra.mxu0 0.0
          %418 = vmatprep.subr.mxu0 %v372
          %419 = vmatpush1.msra.mxu0 %v371
          %420 = vmatprep.subr.mxu0 0.0
          %421 = vmatpush2.msra.mxu0 0.0
          %422 = vmatprep.subr.mxu0 0.0
          %423 = vmatpush2.msra.mxu0 0.0
          %424 = vmatprep.subr.mxu0 0.0
          %425 = vmatpush2.msra.mxu0 0.0
          %426 = vmatprep.subr.mxu0 0.0
          %427 = vmatpush2.msra.mxu0 0.0
          %428 = vmatprep.subr.mxu0 0.0
          %429 = vmatpush2.msra.mxu0 0.0
          %430 = vmatprep.subr.mxu0 0.0
          %431 = vmatpush2.msra.mxu0 0.0
          %432 = vmatprep.subr.mxu0 0.0
          %433 = vmatpush2.msra.mxu0 0.0
          %434 = vmatprep.subr.mxu0 0.0
          %435 = vmatpush2.msra.mxu0 0.0
          %436 = vmatprep.subr.mxu0 0.0
          %437 = vmatpush2.msra.mxu0 0.0
          %438 = vmatprep.subr.mxu0 0.0
          %439 = vmatpush2.msra.mxu0 0.0
          %440 = vmatprep.subr.mxu0 0.0
          %441 = vmatpush2.msra.mxu0 0.0
          %442 = vmatprep.subr.mxu0 0.0
          %443 = vmatpush2.msra.mxu0 0.0
          %444 = vmatprep.subr.mxu0 0.0
          %445 = vmatpush2.msra.mxu0 0.0
          %446 = vmatprep.subr.mxu0 0.0
          %447 = vmatpush2.msra.mxu0 0.0
          %448 = vmatprep.subr.mxu0 0.0
          %449 = vmatpush2.msra.mxu0 0.0
          %450 = vmatprep.subr.mxu0 0.0
          %451 = vmatpush2.msra.mxu0 0.0
          %452 = vmatprep.mubr.f32.mxu0 0.0
          %453 = vmatmul.mubr.f32.gmra.mxu0 %v377
          %v454 = vpop.f32.mrf.mxu0
          %v455 = vadd.f32 %v313, %v454
          %v456 = vpop.f32.mrf.mxu0
          %v457 = vadd.f32 %v313, %v456
          %458 = vmatprep.mubr.f32.mxu0 0.0
          %459 = vmatmul.mubr.f32.gmra.mxu0 %v380
          %v460 = vpop.f32.mrf.mxu0
          %v461 = vadd.f32 %v318, %v460
          %v462 = vpop.f32.mrf.mxu0
          %v463 = vadd.f32 %v318, %v462
          %464 = vmatprep.mubr.f32.mxu0 0.0
          %465 = vmatmul.mubr.f32.gmra.mxu0 %v383
          %v466 = vpop.f32.mrf.mxu0
          %v467 = vadd.f32 %v323, %v466
          %v468 = vpop.f32.mrf.mxu0
          %v469 = vadd.f32 %v323, %v468
          %470 = vmatprep.mubr.f32.mxu0 0.0
          %471 = vmatmul.mubr.f32.gmra.mxu0 %v386
          %v472 = vpop.f32.mrf.mxu0
          %v473 = vadd.f32 %v328, %v472
          %v474 = vpop.f32.mrf.mxu0
          %v475 = vadd.f32 %v328, %v474
          %476 = vdwg.mxu0
          %477 = vmatprep.subr.mxu0 0.0
          %478 = vmatpush1.msra.mxu0 0.0
          %479 = vmatprep.subr.mxu0 0.0
          %480 = vmatpush1.msra.mxu0 0.0
          %481 = vmatprep.subr.mxu0 0.0
          %482 = vmatpush1.msra.mxu0 0.0
          %483 = vmatprep.subr.mxu0 0.0
          %484 = vmatpush1.msra.mxu0 0.0
          %485 = vmatprep.subr.mxu0 0.0
          %486 = vmatpush1.msra.mxu0 0.0
          %487 = vmatprep.subr.mxu0 0.0
          %488 = vmatpush1.msra.mxu0 0.0
          %489 = vmatprep.subr.mxu0 0.0
          %490 = vmatpush1.msra.mxu0 0.0
          %491 = vmatprep.subr.mxu0 0.0
          %492 = vmatpush1.msra.mxu0 0.0
          %493 = vmatprep.subr.mxu0 0.0
          %494 = vmatpush1.msra.mxu0 0.0
          %495 = vmatprep.subr.mxu0 0.0
          %496 = vmatpush1.msra.mxu0 0.0
          %497 = vmatprep.subr.mxu0 0.0
          %498 = vmatpush1.msra.mxu0 0.0
          %499 = vmatprep.subr.mxu0 0.0
          %500 = vmatpush1.msra.mxu0 0.0
          %501 = vmatprep.subr.mxu0 0.0
          %502 = vmatpush1.msra.mxu0 0.0
          %503 = vmatprep.subr.mxu0 0.0
          %504 = vmatpush1.msra.mxu0 0.0
          %505 = vmatprep.subr.mxu0 0.0
          %506 = vmatpush1.msra.mxu0 0.0
          %507 = vmatprep.subr.mxu0 %v374
          %508 = vmatpush1.msra.mxu0 %v373
          %509 = vmatprep.subr.mxu0 0.0
          %510 = vmatpush2.msra.mxu0 0.0
          %511 = vmatprep.subr.mxu0 0.0
          %512 = vmatpush2.msra.mxu0 0.0
          %513 = vmatprep.subr.mxu0 0.0
          %514 = vmatpush2.msra.mxu0 0.0
          %515 = vmatprep.subr.mxu0 0.0
          %516 = vmatpush2.msra.mxu0 0.0
          %517 = vmatprep.subr.mxu0 0.0
          %518 = vmatpush2.msra.mxu0 0.0
          %519 = vmatprep.subr.mxu0 0.0
          %520 = vmatpush2.msra.mxu0 0.0
          %521 = vmatprep.subr.mxu0 0.0
          %522 = vmatpush2.msra.mxu0 0.0
          %523 = vmatprep.subr.mxu0 0.0
          %524 = vmatpush2.msra.mxu0 0.0
          %525 = vmatprep.subr.mxu0 0.0
          %526 = vmatpush2.msra.mxu0 0.0
          %527 = vmatprep.subr.mxu0 0.0
          %528 = vmatpush2.msra.mxu0 0.0
          %529 = vmatprep.subr.mxu0 0.0
          %530 = vmatpush2.msra.mxu0 0.0
          %531 = vmatprep.subr.mxu0 0.0
          %532 = vmatpush2.msra.mxu0 0.0
          %533 = vmatprep.subr.mxu0 0.0
          %534 = vmatpush2.msra.mxu0 0.0
          %535 = vmatprep.subr.mxu0 0.0
          %536 = vmatpush2.msra.mxu0 0.0
          %537 = vmatprep.subr.mxu0 0.0
          %538 = vmatpush2.msra.mxu0 0.0
          %539 = vmatprep.subr.mxu0 0.0
          %540 = vmatpush2.msra.mxu0 0.0
          %541 = vmatprep.mubr.f32.mxu0 0.0
          %542 = vmatmul.mubr.f32.gmra.mxu0 %v377
          %v543 = vpop.f32.mrf.mxu0
          %v544 = vadd.f32 %v313, %v543
          %v545 = vpop.f32.mrf.mxu0
          %v546 = vadd.f32 %v313, %v545
          %547 = vmatprep.mubr.f32.mxu0 0.0
          %548 = vmatmul.mubr.f32.gmra.mxu0 %v380
          %v549 = vpop.f32.mrf.mxu0
          %v550 = vadd.f32 %v318, %v549
          %v551 = vpop.f32.mrf.mxu0
          %v552 = vadd.f32 %v318, %v551
          %553 = vmatprep.mubr.f32.mxu0 0.0
          %554 = vmatmul.mubr.f32.gmra.mxu0 %v383
          %v555 = vpop.f32.mrf.mxu0
          %v556 = vadd.f32 %v323, %v555
          %v557 = vpop.f32.mrf.mxu0
          %v558 = vadd.f32 %v323, %v557
          %559 = vmatprep.mubr.f32.mxu0 0.0
          %560 = vmatmul.mubr.f32.gmra.mxu0 %v386
          %v561 = vpop.f32.mrf.mxu0
          %v562 = vadd.f32 %v328, %v561
          %v563 = vpop.f32.mrf.mxu0
          %v564 = vadd.f32 %v328, %v563
          %565 = vdwg.mxu0
          %v566 = vmax.f32 %v455, 0.0
          %v567 = vmax.f32 %v457, 0.0
          %v568 = vmax.f32 %v544, 0.0
          %v569 = vmax.f32 %v546, 0.0
          %v570 = vmax.f32 %v461, 0.0
          %v571 = vmax.f32 %v463, 0.0
          %v572 = vmax.f32 %v550, 0.0
          %v573 = vmax.f32 %v552, 0.0
          %v574 = vmax.f32 %v467, 0.0
          %v575 = vmax.f32 %v469, 0.0
          %v576 = vmax.f32 %v556, 0.0
          %v577 = vmax.f32 %v558, 0.0
          %v578 = vmax.f32 %v473, 0.0
          %v579 = vmax.f32 %v475, 0.0
          %v580 = vmax.f32 %v562, 0.0
          %v581 = vmax.f32 %v564, 0.0
          %vm582 = vcmask 261120
          %v584 = vsel %vm582, %v301, 0
          %v587 = vsel %vm582, %v302, 0
          %v590 = vsel %vm582, %v303, 0
          %v593 = vsel %vm582, %v304, 0
          %595 = vmatprep.subr.mxu0 0.0
          %596 = vmatpush1.msra.mxu0 0.0
          %597 = vmatprep.subr.mxu0 0.0
          %598 = vmatpush1.msra.mxu0 0.0
          %599 = vmatprep.subr.mxu0 0.0
          %600 = vmatpush1.msra.mxu0 0.0
          %601 = vmatprep.subr.mxu0 0.0
          %602 = vmatpush1.msra.mxu0 0.0
          %603 = vmatprep.subr.mxu0 0.0
          %604 = vmatpush1.msra.mxu0 0.0
          %605 = vmatprep.subr.mxu0 0.0
          %606 = vmatpush1.msra.mxu0 0.0
          %607 = vmatprep.subr.mxu0 0.0
          %608 = vmatpush1.msra.mxu0 0.0
          %609 = vmatprep.subr.mxu0 0.0
          %610 = vmatpush1.msra.mxu0 0.0
          %611 = vmatprep.subr.mxu0 0.0
          %612 = vmatpush1.msra.mxu0 0.0
          %613 = vmatprep.subr.mxu0 0.0
          %614 = vmatpush1.msra.mxu0 0.0
          %615 = vmatprep.subr.mxu0 0.0
          %616 = vmatpush1.msra.mxu0 0.0
          %617 = vmatprep.subr.mxu0 0.0
          %618 = vmatpush1.msra.mxu0 0.0
          %619 = vmatprep.subr.mxu0 %v579
          %620 = vmatpush1.msra.mxu0 %v578
          %621 = vmatprep.subr.mxu0 %v575
          %622 = vmatpush1.msra.mxu0 %v574
          %623 = vmatprep.subr.mxu0 %v571
          %624 = vmatpush1.msra.mxu0 %v570
          %625 = vmatprep.subr.mxu0 %v567
          %626 = vmatpush1.msra.mxu0 %v566
          %627 = vmatprep.subr.mxu0 0.0
          %628 = vmatpush2.msra.mxu0 0.0
          %629 = vmatprep.subr.mxu0 0.0
          %630 = vmatpush2.msra.mxu0 0.0
          %631 = vmatprep.subr.mxu0 0.0
          %632 = vmatpush2.msra.mxu0 0.0
          %633 = vmatprep.subr.mxu0 0.0
          %634 = vmatpush2.msra.mxu0 0.0
          %635 = vmatprep.subr.mxu0 0.0
          %636 = vmatpush2.msra.mxu0 0.0
          %637 = vmatprep.subr.mxu0 0.0
          %638 = vmatpush2.msra.mxu0 0.0
          %639 = vmatprep.subr.mxu0 0.0
          %640 = vmatpush2.msra.mxu0 0.0
          %641 = vmatprep.subr.mxu0 0.0
          %642 = vmatpush2.msra.mxu0 0.0
          %643 = vmatprep.subr.mxu0 0.0
          %644 = vmatpush2.msra.mxu0 0.0
          %645 = vmatprep.subr.mxu0 0.0
          %646 = vmatpush2.msra.mxu0 0.0
          %647 = vmatprep.subr.mxu0 0.0
          %648 = vmatpush2.msra.mxu0 0.0
          %649 = vmatprep.subr.mxu0 0.0
          %650 = vmatpush2.msra.mxu0 0.0
          %651 = vmatprep.subr.mxu0 0.0
          %652 = vmatpush2.msra.mxu0 0.0
          %653 = vmatprep.subr.mxu0 0.0
          %654 = vmatpush2.msra.mxu0 0.0
          %655 = vmatprep.subr.mxu0 0.0
          %656 = vmatpush2.msra.mxu0 0.0
          %657 = vmatprep.subr.mxu0 0.0
          %658 = vmatpush2.msra.mxu0 0.0
          %659 = vmatprep.mubr.f32.mxu0 0.0
          %660 = vmatmul.mubr.f32.gmra.mxu0 %v584
          %v661 = vpop.f32.mrf.mxu0
          %v662 = vadd.f32 %v337, %v661
          %v663 = vpop.f32.mrf.mxu0
          %v664 = vadd.f32 %v337, %v663
          %665 = vmatprep.mubr.f32.mxu0 0.0
          %666 = vmatmul.mubr.f32.gmra.mxu0 %v587
          %v667 = vpop.f32.mrf.mxu0
          %v668 = vadd.f32 %v342, %v667
          %v669 = vpop.f32.mrf.mxu0
          %v670 = vadd.f32 %v342, %v669
          %671 = vmatprep.mubr.f32.mxu0 0.0
          %672 = vmatmul.mubr.f32.gmra.mxu0 %v590
          %v673 = vpop.f32.mrf.mxu0
          %v674 = vadd.f32 %v347, %v673
          %v675 = vpop.f32.mrf.mxu0
          %v676 = vadd.f32 %v347, %v675
          %677 = vmatprep.mubr.f32.mxu0 0.0
          %678 = vmatmul.mubr.f32.gmra.mxu0 %v593
          %v679 = vpop.f32.mrf.mxu0
          %v680 = vadd.f32 %v352, %v679
          %v681 = vpop.f32.mrf.mxu0
          %v682 = vadd.f32 %v352, %v681
          %683 = vdwg.mxu0
          %684 = vmatprep.subr.mxu0 0.0
          %685 = vmatpush1.msra.mxu0 0.0
          %686 = vmatprep.subr.mxu0 0.0
          %687 = vmatpush1.msra.mxu0 0.0
          %688 = vmatprep.subr.mxu0 0.0
          %689 = vmatpush1.msra.mxu0 0.0
          %690 = vmatprep.subr.mxu0 0.0
          %691 = vmatpush1.msra.mxu0 0.0
          %692 = vmatprep.subr.mxu0 0.0
          %693 = vmatpush1.msra.mxu0 0.0
          %694 = vmatprep.subr.mxu0 0.0
          %695 = vmatpush1.msra.mxu0 0.0
          %696 = vmatprep.subr.mxu0 0.0
          %697 = vmatpush1.msra.mxu0 0.0
          %698 = vmatprep.subr.mxu0 0.0
          %699 = vmatpush1.msra.mxu0 0.0
          %700 = vmatprep.subr.mxu0 0.0
          %701 = vmatpush1.msra.mxu0 0.0
          %702 = vmatprep.subr.mxu0 0.0
          %703 = vmatpush1.msra.mxu0 0.0
          %704 = vmatprep.subr.mxu0 0.0
          %705 = vmatpush1.msra.mxu0 0.0
          %706 = vmatprep.subr.mxu0 0.0
          %707 = vmatpush1.msra.mxu0 0.0
          %708 = vmatprep.subr.mxu0 %v581
          %709 = vmatpush1.msra.mxu0 %v580
          %710 = vmatprep.subr.mxu0 %v577
          %711 = vmatpush1.msra.mxu0 %v576
          %712 = vmatprep.subr.mxu0 %v573
          %713 = vmatpush1.msra.mxu0 %v572
          %714 = vmatprep.subr.mxu0 %v569
          %715 = vmatpush1.msra.mxu0 %v568
          %716 = vmatprep.subr.mxu0 0.0
          %717 = vmatpush2.msra.mxu0 0.0
          %718 = vmatprep.subr.mxu0 0.0
          %719 = vmatpush2.msra.mxu0 0.0
          %720 = vmatprep.subr.mxu0 0.0
          %721 = vmatpush2.msra.mxu0 0.0
          %722 = vmatprep.subr.mxu0 0.0
          %723 = vmatpush2.msra.mxu0 0.0
          %724 = vmatprep.subr.mxu0 0.0
          %725 = vmatpush2.msra.mxu0 0.0
          %726 = vmatprep.subr.mxu0 0.0
          %727 = vmatpush2.msra.mxu0 0.0
          %728 = vmatprep.subr.mxu0 0.0
          %729 = vmatpush2.msra.mxu0 0.0
          %730 = vmatprep.subr.mxu0 0.0
          %731 = vmatpush2.msra.mxu0 0.0
          %732 = vmatprep.subr.mxu0 0.0
          %733 = vmatpush2.msra.mxu0 0.0
          %734 = vmatprep.subr.mxu0 0.0
          %735 = vmatpush2.msra.mxu0 0.0
          %736 = vmatprep.subr.mxu0 0.0
          %737 = vmatpush2.msra.mxu0 0.0
          %738 = vmatprep.subr.mxu0 0.0
          %739 = vmatpush2.msra.mxu0 0.0
          %740 = vmatprep.subr.mxu0 0.0
          %741 = vmatpush2.msra.mxu0 0.0
          %742 = vmatprep.subr.mxu0 0.0
          %743 = vmatpush2.msra.mxu0 0.0
          %744 = vmatprep.subr.mxu0 0.0
          %745 = vmatpush2.msra.mxu0 0.0
          %746 = vmatprep.subr.mxu0 0.0
          %747 = vmatpush2.msra.mxu0 0.0
          %748 = vmatprep.mubr.f32.mxu0 0.0
          %749 = vmatmul.mubr.f32.gmra.mxu0 %v584
          %v750 = vpop.f32.mrf.mxu0
          %v751 = vadd.f32 %v337, %v750
          %v752 = vpop.f32.mrf.mxu0
          %v753 = vadd.f32 %v337, %v752
          %754 = vmatprep.mubr.f32.mxu0 0.0
          %755 = vmatmul.mubr.f32.gmra.mxu0 %v587
          %v756 = vpop.f32.mrf.mxu0
          %v757 = vadd.f32 %v342, %v756
          %v758 = vpop.f32.mrf.mxu0
          %v759 = vadd.f32 %v342, %v758
          %760 = vmatprep.mubr.f32.mxu0 0.0
          %761 = vmatmul.mubr.f32.gmra.mxu0 %v590
          %v762 = vpop.f32.mrf.mxu0
          %v763 = vadd.f32 %v347, %v762
          %v764 = vpop.f32.mrf.mxu0
          %v765 = vadd.f32 %v347, %v764
          %766 = vmatprep.mubr.f32.mxu0 0.0
          %767 = vmatmul.mubr.f32.gmra.mxu0 %v593
          %v768 = vpop.f32.mrf.mxu0
          %v769 = vadd.f32 %v352, %v768
          %v770 = vpop.f32.mrf.mxu0
          %v771 = vadd.f32 %v352, %v770
          %772 = vdwg.mxu0
          %v773 = vmax.f32 %v662, 0.0
          %v774 = vmax.f32 %v664, 0.0
          %v775 = vmax.f32 %v751, 0.0
          %v776 = vmax.f32 %v753, 0.0
          %v777 = vmax.f32 %v668, 0.0
          %v778 = vmax.f32 %v670, 0.0
          %v779 = vmax.f32 %v757, 0.0
          %v780 = vmax.f32 %v759, 0.0
          %v781 = vmax.f32 %v674, 0.0
          %v782 = vmax.f32 %v676, 0.0
          %v783 = vmax.f32 %v763, 0.0
          %v784 = vmax.f32 %v765, 0.0
          %v785 = vmax.f32 %v680, 0.0
          %v786 = vmax.f32 %v682, 0.0
          %v787 = vmax.f32 %v769, 0.0
          %v788 = vmax.f32 %v771, 0.0
          %v790 = vsel %vm582, %v305, 0
          %792 = vmatprep.subr.mxu0 0.0
          %793 = vmatpush1.msra.mxu0 0.0
          %794 = vmatprep.subr.mxu0 0.0
          %795 = vmatpush1.msra.mxu0 0.0
          %796 = vmatprep.subr.mxu0 0.0
          %797 = vmatpush1.msra.mxu0 0.0
          %798 = vmatprep.subr.mxu0 0.0
          %799 = vmatpush1.msra.mxu0 0.0
          %800 = vmatprep.subr.mxu0 0.0
          %801 = vmatpush1.msra.mxu0 0.0
          %802 = vmatprep.subr.mxu0 0.0
          %803 = vmatpush1.msra.mxu0 0.0
          %804 = vmatprep.subr.mxu0 0.0
          %805 = vmatpush1.msra.mxu0 0.0
          %806 = vmatprep.subr.mxu0 0.0
          %807 = vmatpush1.msra.mxu0 0.0
          %808 = vmatprep.subr.mxu0 0.0
          %809 = vmatpush1.msra.mxu0 0.0
          %810 = vmatprep.subr.mxu0 0.0
          %811 = vmatpush1.msra.mxu0 0.0
          %812 = vmatprep.subr.mxu0 0.0
          %813 = vmatpush1.msra.mxu0 0.0
          %814 = vmatprep.subr.mxu0 0.0
          %815 = vmatpush1.msra.mxu0 0.0
          %816 = vmatprep.subr.mxu0 %v786
          %817 = vmatpush1.msra.mxu0 %v785
          %818 = vmatprep.subr.mxu0 %v782
          %819 = vmatpush1.msra.mxu0 %v781
          %820 = vmatprep.subr.mxu0 %v778
          %821 = vmatpush1.msra.mxu0 %v777
          %822 = vmatprep.subr.mxu0 %v774
          %823 = vmatpush1.msra.mxu0 %v773
          %824 = vmatprep.subr.mxu0 0.0
          %825 = vmatpush2.msra.mxu0 0.0
          %826 = vmatprep.subr.mxu0 0.0
          %827 = vmatpush2.msra.mxu0 0.0
          %828 = vmatprep.subr.mxu0 0.0
          %829 = vmatpush2.msra.mxu0 0.0
          %830 = vmatprep.subr.mxu0 0.0
          %831 = vmatpush2.msra.mxu0 0.0
          %832 = vmatprep.subr.mxu0 0.0
          %833 = vmatpush2.msra.mxu0 0.0
          %834 = vmatprep.subr.mxu0 0.0
          %835 = vmatpush2.msra.mxu0 0.0
          %836 = vmatprep.subr.mxu0 0.0
          %837 = vmatpush2.msra.mxu0 0.0
          %838 = vmatprep.subr.mxu0 0.0
          %839 = vmatpush2.msra.mxu0 0.0
          %840 = vmatprep.subr.mxu0 0.0
          %841 = vmatpush2.msra.mxu0 0.0
          %842 = vmatprep.subr.mxu0 0.0
          %843 = vmatpush2.msra.mxu0 0.0
          %844 = vmatprep.subr.mxu0 0.0
          %845 = vmatpush2.msra.mxu0 0.0
          %846 = vmatprep.subr.mxu0 0.0
          %847 = vmatpush2.msra.mxu0 0.0
          %848 = vmatprep.subr.mxu0 0.0
          %849 = vmatpush2.msra.mxu0 0.0
          %850 = vmatprep.subr.mxu0 0.0
          %851 = vmatpush2.msra.mxu0 0.0
          %852 = vmatprep.subr.mxu0 0.0
          %853 = vmatpush2.msra.mxu0 0.0
          %854 = vmatprep.subr.mxu0 0.0
          %855 = vmatpush2.msra.mxu0 0.0
          %856 = vmatprep.mubr.f32.mxu0 0.0
          %857 = vmatmul.mubr.f32.gmra.mxu0 %v790
          %v858 = vpop.f32.mrf.mxu0
          %v859 = vadd.f32 %v358, %v858
          %v860 = vpop.f32.mrf.mxu0
          %v861 = vadd.f32 %v358, %v860
          %862 = vdwg.mxu0
          %863 = vmatprep.subr.mxu0 0.0
          %864 = vmatpush1.msra.mxu0 0.0
          %865 = vmatprep.subr.mxu0 0.0
          %866 = vmatpush1.msra.mxu0 0.0
          %867 = vmatprep.subr.mxu0 0.0
          %868 = vmatpush1.msra.mxu0 0.0
          %869 = vmatprep.subr.mxu0 0.0
          %870 = vmatpush1.msra.mxu0 0.0
          %871 = vmatprep.subr.mxu0 0.0
          %872 = vmatpush1.msra.mxu0 0.0
          %873 = vmatprep.subr.mxu0 0.0
          %874 = vmatpush1.msra.mxu0 0.0
          %875 = vmatprep.subr.mxu0 0.0
          %876 = vmatpush1.msra.mxu0 0.0
          %877 = vmatprep.subr.mxu0 0.0
          %878 = vmatpush1.msra.mxu0 0.0
          %879 = vmatprep.subr.mxu0 0.0
          %880 = vmatpush1.msra.mxu0 0.0
          %881 = vmatprep.subr.mxu0 0.0
          %882 = vmatpush1.msra.mxu0 0.0
          %883 = vmatprep.subr.mxu0 0.0
          %884 = vmatpush1.msra.mxu0 0.0
          %885 = vmatprep.subr.mxu0 0.0
          %886 = vmatpush1.msra.mxu0 0.0
          %887 = vmatprep.subr.mxu0 %v788
          %888 = vmatpush1.msra.mxu0 %v787
          %889 = vmatprep.subr.mxu0 %v784
          %890 = vmatpush1.msra.mxu0 %v783
          %891 = vmatprep.subr.mxu0 %v780
          %892 = vmatpush1.msra.mxu0 %v779
          %893 = vmatprep.subr.mxu0 %v776
          %894 = vmatpush1.msra.mxu0 %v775
          %895 = vmatprep.subr.mxu0 0.0
          %896 = vmatpush2.msra.mxu0 0.0
          %897 = vmatprep.subr.mxu0 0.0
          %898 = vmatpush2.msra.mxu0 0.0
          %899 = vmatprep.subr.mxu0 0.0
          %900 = vmatpush2.msra.mxu0 0.0
          %901 = vmatprep.subr.mxu0 0.0
          %902 = vmatpush2.msra.mxu0 0.0
          %903 = vmatprep.subr.mxu0 0.0
          %904 = vmatpush2.msra.mxu0 0.0
          %905 = vmatprep.subr.mxu0 0.0
          %906 = vmatpush2.msra.mxu0 0.0
          %907 = vmatprep.subr.mxu0 0.0
          %908 = vmatpush2.msra.mxu0 0.0
          %909 = vmatprep.subr.mxu0 0.0
          %910 = vmatpush2.msra.mxu0 0.0
          %911 = vmatprep.subr.mxu0 0.0
          %912 = vmatpush2.msra.mxu0 0.0
          %913 = vmatprep.subr.mxu0 0.0
          %914 = vmatpush2.msra.mxu0 0.0
          %915 = vmatprep.subr.mxu0 0.0
          %916 = vmatpush2.msra.mxu0 0.0
          %917 = vmatprep.subr.mxu0 0.0
          %918 = vmatpush2.msra.mxu0 0.0
          %919 = vmatprep.subr.mxu0 0.0
          %920 = vmatpush2.msra.mxu0 0.0
          %921 = vmatprep.subr.mxu0 0.0
          %922 = vmatpush2.msra.mxu0 0.0
          %923 = vmatprep.subr.mxu0 0.0
          %924 = vmatpush2.msra.mxu0 0.0
          %925 = vmatprep.subr.mxu0 0.0
          %926 = vmatpush2.msra.mxu0 0.0
          %927 = vmatprep.mubr.f32.mxu0 0.0
          %928 = vmatmul.mubr.f32.gmra.mxu0 %v790
          %v929 = vpop.f32.mrf.mxu0
          %v930 = vadd.f32 %v358, %v929
          %v931 = vpop.f32.mrf.mxu0
          %v932 = vadd.f32 %v358, %v931
          %933 = vdwg.mxu0
          %v934 = vmul.f32 %v371, -0.5
          %v935 = vmul.f32 %v372, -0.5
          %v936 = vmul.f32 %v373, -0.5
          %v937 = vmul.f32 %v374, -0.5
          %v942 = vrot.slane %v934, 1
          %v943 = vrot.slane %v935, 1
          %v944 = vrot.slane %v936, 1
          %v945 = vrot.slane %v937, 1
          %v950 = vadd.f32 %v859, %v942
          %v951 = vadd.f32 %v861, %v943
          %v952 = vadd.f32 %v930, %v944
          %v953 = vadd.f32 %v932, %v945
          %v958 = vcombine.low %v950, %v951
          %v959 = vcombine.low %v952, %v953
          %s962 = smul.addr %s367, 4
          %s963 = scalar_lea.vmem %s294, %s962 [#allocation5]
          %964 = vst [vmem:[%s963] sm:$0xff] %v958
          %965 = vst [vmem:[%s963 + $0x8] sm:$0xff] %v959
        $region57: #{tpu_custom_call.1} parent=47 // loop_footer
          %s365 = sadd.s32 1, %s361
        $region58: #{tpu_custom_call.1} parent=47 // loop_footer_branch
          %360 = sbr.rel target = $region54
        $region59: #{tpu_custom_call.1} parent=47 // loop_exit
          _
        %s966 = sand.u32 %s184, 1
        %s967 = scalar_lea.sflag [#allocation4], %s966
        %s968 = sand.u32 %s184, 1
        %s969 = smul.addr %s968, 32
        %s970 = scalar_lea.vmem [#allocation5], %s969
        // Predicated region
        $region60: #{tpu_custom_call.1} parent=47 // pred_check
          %p971 = pneg %p194
        $region61: #{tpu_custom_call.1} parent=47 // pred_check_branch
          %973 = sbr.rel (%p971) target = $region63
        $region62: #{tpu_custom_call.1} parent=47 // pred_region
          %s974 = smul.u32 8, %s24
          %s976 = ssub.s32 512, 512
          %977 = vsyncadd %s967, %s976
          %s978 = smul.addr %s974, 64
          %s979 = scalar_lea.hbm %s7, %s978
          %s981 = sshll.u32 %s970, 4
          %s982 = int_to_ptr.vmem [resolvable:$true] %s981
          %984 = dma.vmem_to_hbm [thread:$0]  %s982, 512, %s979, %s967
        $region63: #{tpu_custom_call.1} parent=47 // pred_fallthru
          _
      $region48: #{tpu_custom_call.1} parent=5 // pred_fallthru
        _
      %p985 = scmp.le.s32.totalorder 2, %s19
      // Predicated region
      $region64: #{tpu_custom_call.1} parent=5 // pred_check
        %p986 = pneg %p985
      $region65: #{tpu_custom_call.1} parent=5 // pred_check_branch
        %988 = sbr.rel (%p986) target = $region67
      $region66: #{tpu_custom_call.1} parent=5 // pred_region
        %s989 = ssub.s32 %s19, 2
        // Predicated region
        $region68: #{tpu_custom_call.1} parent=66 // pred_check
          %p990 = pneg %p200
        $region69: #{tpu_custom_call.1} parent=66 // pred_check_branch
          %992 = sbr.rel (%p990) target = $region71
        $region70: #{tpu_custom_call.1} parent=66 // pred_region
          %s993 = sand.u32 %s185, 1
          %s994 = scalar_lea.sflag [#allocation4], %s993
          %s995 = sand.u32 %s185, 1
          %s996 = smul.addr %s995, 32
          %s997 = scalar_lea.vmem [#allocation5], %s996
          %998 = dma.done %s994, 512
        $region71: #{tpu_custom_call.1} parent=66 // pred_fallthru
          _
      $region67: #{tpu_custom_call.1} parent=5 // pred_fallthru
        _
    $region6: #{tpu_custom_call.1} parent=1 // loop_footer
      %s23 = sadd.s32 1, %s19
    $region7: #{tpu_custom_call.1} parent=1 // loop_footer_branch
      %18 = sbr.rel target = $region3
    $region8: #{tpu_custom_call.1} parent=1 // loop_exit
      _
    %999 = vsyncpa [#allocation3], 1
    %s1000 = scalar_lea.sflag [#allocation3], 1
    %1001 = vsyncpa %s1000, 1
    %1002 = vsyncpa [#allocation4], 1
    %s1003 = scalar_lea.sflag [#allocation4], 1
    %1004 = vsyncpa %s1003, 1

</llo_original>
